<compile_context>
chip_gen: v5e
topology: v5e:2x2
jax: 0.10.0
libtpu: 0.0.40
codegen_flags: <defaults>
</compile_context>

<pallas_src>
import functools

import jax
import jax.numpy as jnp
from jax.experimental import pallas as pl
from jax.experimental.pallas import tpu as pltpu


def _round_up(x, m):
    return (x + m - 1) // m * m


# ----------------------------------------------------------------------------
# Pallas kernel: per spatial tile -> matmul + bias + ReLU + partial avg-pool.
# ----------------------------------------------------------------------------
def _extractor_kernel(x_ref, w_ref, b_ref, o_ref, *, inv_s):
    ss = pl.program_id(0)

    @pl.when(ss == 0)
    def _init():
        o_ref[...] = jnp.zeros_like(o_ref)

    # (ts*B, Kp) @ (Kp, Fp) on the MXU; bias + ReLU on the VPU.
    h = jnp.dot(x_ref[...], w_ref[...], preferred_element_type=jnp.float32)
    h = jnp.maximum(h + b_ref[...], 0.0)

    # rows are spatial-major / batch-minor: fold the spatial sub-axis and
    # accumulate per-batch partial sums into the resident output block.
    ts_b, fp = h.shape
    bsz = o_ref.shape[0]
    o_ref[...] += jnp.sum(h.reshape(ts_b // bsz, bsz, fp), axis=0)

    @pl.when(ss == pl.num_programs(0) - 1)
    def _finalize():
        o_ref[...] = o_ref[...] * inv_s          # mean over all S positions


# ----------------------------------------------------------------------------
# Wrapper: patchify (layout plumbing), padding, pallas_call.
# ----------------------------------------------------------------------------
def loss_feature_extractor(images, w, b, *, patch, ts=None):
    """images (B, C, H, W) -> features (B, F).  Synthetic ResNet stand-in."""
    B, C, H, W = images.shape
    P = patch
    assert H % P == 0 and W % P == 0
    sh, sw = H // P, W // P
    S = sh * sw
    D_in = C * P * P
    F = w.shape[1]
    assert w.shape[0] == D_in and b.shape == (1, F)

    # im2col, spatial-major / batch-minor row ordering: row = s * B + b
    x = images.reshape(B, C, sh, P, sw, P)
    x = x.transpose(2, 4, 0, 1, 3, 5).reshape(S * B, D_in)

    # zero-pad contraction / feature dims to lane multiples (contribute zeros).
    Kp = _round_up(D_in, 128)
    Fp = _round_up(F, 128)
    x_p = jnp.pad(x, ((0, 0), (0, Kp - D_in)))
    w_p = jnp.pad(w, ((0, Kp - D_in), (0, Fp - F)))
    b_p = jnp.pad(b, ((0, 0), (0, Fp - F)))

    if ts is None:
        ts = S                      # biggest tile that fits: single grid step
    assert S % ts == 0 and (ts * B) % 8 == 0
    num_s = S // ts

    out = pl.pallas_call(
        functools.partial(_extractor_kernel, inv_s=1.0 / S),
        out_shape=jax.ShapeDtypeStruct((B, Fp), jnp.float32),
        grid_spec=pltpu.PrefetchScalarGridSpec(
            num_scalar_prefetch=0,
            grid=(num_s,),
            in_specs=[
                pl.BlockSpec((ts * B, Kp), lambda ss: (ss, 0)),   # patch rows
                pl.BlockSpec((Kp, Fp), lambda ss: (0, 0)),        # weight
                pl.BlockSpec((1, Fp), lambda ss: (0, 0)),         # bias
            ],
            out_specs=pl.BlockSpec((B, Fp), lambda ss: (0, 0)),   # resident acc
        ),
        compiler_params=pltpu.CompilerParams(
            dimension_semantics=("arbitrary",)),
    )(x_p, w_p, b_p)

    return out[:, :F]                # strip feature padding == .view(B, -1)


# ----------------------------------------------------------------------------
# Pure-JAX reference (same synthetic extractor), for correctness checking.
# ----------------------------------------------------------------------------
def loss_feature_extractor_ref(images, w, b, *, patch):
    B, C, H, W = images.shape
    P = patch
    sh, sw = H // P, W // P
    S = sh * sw
    D_in = C * P * P
    x = images.reshape(B, C, sh, P, sw, P)
    x = x.transpose(0, 2, 4, 1, 3, 5).reshape(B, S, D_in)
    h = jnp.maximum(jnp.einsum("bsd,df->bsf", x, w) + b, 0.0)
    feats = jnp.mean(h, axis=1)                 # global average pool
    return feats.reshape(B, -1)                 # features.view(B, -1)


if __name__ == "__main__":
    key = jax.random.PRNGKey(0)
    B, C, H, W = 2, 4, 16, 16
    P = 4                       # stride-P patch conv (trunk stand-in)
    F_out = 256                 # real module: output_size = 2048 (kept small)
    D_in = C * P * P            # 64

    k1, k2, k3 = jax.random.split(key, 3)
    images = jax.random.normal(k1, (B, C, H, W), jnp.float32)
    w = jax.random.normal(k2, (D_in, F_out), jnp.float32) / jnp.sqrt(D_in)
    b = jax.random.normal(k3, (1, F_out), jnp.float32) * 0.1

    # ts=8 -> 2 grid steps: exercises the multi-step accumulation path.
    feats = loss_feature_extractor(images, w, b, patch=P, ts=8)
    feats = jax.block_until_ready(feats)

    ref = loss_feature_extractor_ref(images, w, b, patch=P)
    assert feats.shape == (B, F_out), feats.shape
    err = float(jnp.max(jnp.abs(feats - ref)))
    scale = float(jnp.max(jnp.abs(ref))) + 1e-6
    assert err <= 1e-3 * scale + 1e-5, (err, scale)
    print("KERNEL_OK")
</pallas_src>

<mosaic_0001>
module attributes {stable_mosaic.version = 11 : i64} {
  func.func @_extractor_kernel(%arg0: i32, %arg1: memref<16x128xf32, #tpu.memory_space<vmem>>, %arg2: memref<128x256xf32, #tpu.memory_space<vmem>>, %arg3: memref<1x256xf32, #tpu.memory_space<vmem>>, %arg4: memref<2x256xf32, #tpu.memory_space<vmem>>) attributes {dimension_semantics = [#tpu.dimension_semantics<arbitrary>], iteration_bounds = array<i64: 2>, scalar_prefetch = 0 : i64, scratch_operands = 0 : i64, tpu.core_type = #tpu.core_type<tc>, window_params = [{transform_indices = @transform_0, window_bounds = array<i64: 16, 128>}, {pipeline_mode = #tpu.pipeline_mode<synchronous>, transform_indices = @transform_1, window_bounds = array<i64: 128, 256>}, {pipeline_mode = #tpu.pipeline_mode<synchronous>, transform_indices = @transform_2, window_bounds = array<i64: 1, 256>}, {pipeline_mode = #tpu.pipeline_mode<synchronous>, transform_indices = @transform_3, window_bounds = array<i64: 2, 256>}]} {
    %c0_i32 = arith.constant 0 : i32
    %0 = arith.cmpi eq, %arg0, %c0_i32 : i32
    %1 = arith.extui %0 : i1 to i32
    %c0_i32_0 = arith.constant 0 : i32
    %2 = arith.cmpi ne, %1, %c0_i32_0 : i32
    scf.if %2 {
      %cst_13 = arith.constant 0.000000e+00 : f32
      %19 = vector.broadcast %cst_13 : f32 to vector<2x256xf32>
      %c0_14 = arith.constant 0 : index
      %c0_15 = arith.constant 0 : index
      %20 = vector.load %arg4[%c0_14, %c0_15] : memref<2x256xf32, #tpu.memory_space<vmem>>, vector<2x256xf32>
      tpu.vector_store %arg4[%c0_14, %c0_15], %19 {strides = array<i32>} : memref<2x256xf32, #tpu.memory_space<vmem>>, vector<2x256xf32>,
    } else {
    }
    %c0 = arith.constant 0 : index
    %c0_1 = arith.constant 0 : index
    %3 = vector.load %arg1[%c0, %c0_1] : memref<16x128xf32, #tpu.memory_space<vmem>>, vector<16x128xf32>
    %c0_2 = arith.constant 0 : index
    %c0_3 = arith.constant 0 : index
    %4 = vector.load %arg2[%c0_2, %c0_3] : memref<128x256xf32, #tpu.memory_space<vmem>>, vector<128x256xf32>
    %cst = arith.constant dense<0.000000e+00> : vector<16x256xf32>
    %5 = tpu.matmul %3, %4, %cst {dimension_numbers = #tpu.dot_dimension_numbers<[1], [0], [0], [1], [0, 0, 1, 1], [], []>} : vector<16x128xf32>, vector<128x256xf32>, vector<16x256xf32> -> vector<16x256xf32>
    %c0_4 = arith.constant 0 : index
    %c0_5 = arith.constant 0 : index
    %6 = vector.load %arg3[%c0_4, %c0_5] : memref<1x256xf32, #tpu.memory_space<vmem>>, vector<1x256xf32>
    %7 = vector.broadcast %6 : vector<1x256xf32> to vector<16x256xf32>
    %8 = arith.addf %5, %7 : vector<16x256xf32>
    %cst_6 = arith.constant 0.000000e+00 : f32
    %9 = vector.broadcast %cst_6 : f32 to vector<16x256xf32>
    %10 = arith.maximumf %8, %9 : vector<16x256xf32>
    %c0_7 = arith.constant 0 : index
    %c0_8 = arith.constant 0 : index
    %11 = vector.load %arg4[%c0_7, %c0_8] : memref<2x256xf32, #tpu.memory_space<vmem>>, vector<2x256xf32>
    %12 = vector.shape_cast %10 : vector<16x256xf32> to vector<8x2x256xf32>
    %cst_9 = arith.constant dense<0.000000e+00> : vector<2x256xf32>
    %13 = vector.multi_reduction <add>, %12, %cst_9 [0] : vector<8x2x256xf32> to vector<2x256xf32>
    %14 = arith.addf %11, %13 : vector<2x256xf32>
    %c0_10 = arith.constant 0 : index
    %c0_11 = arith.constant 0 : index
    %15 = vector.load %arg4[%c0_10, %c0_11] : memref<2x256xf32, #tpu.memory_space<vmem>>, vector<2x256xf32>
    tpu.vector_store %arg4[%c0_10, %c0_11], %14 {strides = array<i32>} : memref<2x256xf32, #tpu.memory_space<vmem>>, vector<2x256xf32>,
    %c1_i32 = arith.constant 1 : i32
    %16 = arith.cmpi eq, %arg0, %c1_i32 : i32
    %17 = arith.extui %16 : i1 to i32
    %c0_i32_12 = arith.constant 0 : i32
    %18 = arith.cmpi ne, %17, %c0_i32_12 : i32
    scf.if %18 {
      %c0_13 = arith.constant 0 : index
      %c0_14 = arith.constant 0 : index
      %19 = vector.load %arg4[%c0_13, %c0_14] : memref<2x256xf32, #tpu.memory_space<vmem>>, vector<2x256xf32>
      %cst_15 = arith.constant 6.250000e-02 : f32
      %20 = vector.broadcast %cst_15 : f32 to vector<2x256xf32>
      %21 = arith.mulf %19, %20 : vector<2x256xf32>
      %c0_16 = arith.constant 0 : index
      %c0_17 = arith.constant 0 : index
      %22 = vector.load %arg4[%c0_16, %c0_17] : memref<2x256xf32, #tpu.memory_space<vmem>>, vector<2x256xf32>
      tpu.vector_store %arg4[%c0_16, %c0_17], %21 {strides = array<i32>} : memref<2x256xf32, #tpu.memory_space<vmem>>, vector<2x256xf32>,
    } else {
    }
    return
  }
  func.func @transform_0(%arg0: i32) -> (i32, i32) {
    %c0_i32 = arith.constant 0 : i32
    %c0_i32_0 = arith.constant 0 : i32
    return %arg0, %c0_i32 : i32, i32
  }
  func.func @transform_1(%arg0: i32) -> (i32, i32) {
    %c0_i32 = arith.constant 0 : i32
    %c0_i32_0 = arith.constant 0 : i32
    %c0_i32_1 = arith.constant 0 : i32
    return %c0_i32, %c0_i32_0 : i32, i32
  }
  func.func @transform_2(%arg0: i32) -> (i32, i32) {
    %c0_i32 = arith.constant 0 : i32
    %c0_i32_0 = arith.constant 0 : i32
    %c0_i32_1 = arith.constant 0 : i32
    return %c0_i32, %c0_i32_0 : i32, i32
  }
  func.func @transform_3(%arg0: i32) -> (i32, i32) {
    %c0_i32 = arith.constant 0 : i32
    %c0_i32_0 = arith.constant 0 : i32
    %c0_i32_1 = arith.constant 0 : i32
    return %c0_i32, %c0_i32_0 : i32, i32
  }
}

</mosaic_0001>

<llo_original>
// kernel: tpu_custom_call.1
$region0: #{tpu_custom_call.1}
  #allocation0 [shape = 'u32[]', space=smem, size = 0x4, offset = 0x4, fixed_abs, tag = 'smem constant byte address 0x4 - core index']
  #allocation1 [shape = 'u32[72,128]{1,0:T(1,128)}', space=vmem, size = 0x9000, scoped, tag = 'internal scratch']
  %s0 = inlined_call_operand.hbm [shape: f32[32,128], index: 0, kind: input, shape index: {}]
  %s1 = inlined_call_operand.hbm [shape: f32[128,256], index: 1, kind: input, shape index: {}]
  %s2 = inlined_call_operand.hbm [shape: f32[1,256], index: 2, kind: input, shape index: {}]
  %s3 = inlined_call_operand.hbm [shape: f32[2,256], index: 3, kind: output, shape index: {}]
  %s4 = sld [smem:[#allocation0]]
  $region65: #{tpu_custom_call.1} parent=0
    _
  %s6 = ssub.s32 1, %s4
  %s7 = scalar_select 0, %s6, %s4
  $region1: #{tpu_custom_call.1} parent=0
    #allocation2 [shape = 'u8[16384]{0}', space=vmem, size = 0x4000, scoped, tag = 'input window, operand 0']
    #allocation3 [shape = 's32[2]{0}', space=sflag, size = 0x8, scoped, tag = 'scoped memory for tpu_custom_call.1']
    #allocation4 [shape = 's32[2]{0}', space=sflag, size = 0x8, scoped, tag = 'scoped memory for tpu_custom_call.1']
    #allocation5 [shape = 'u8[131072]{0}', space=vmem, size = 0x20000, scoped, tag = 'input window, operand 1, single buffered']
    #allocation6 [shape = 's32[1]{0}', space=sflag, size = 0x4, scoped, tag = 'scoped memory for tpu_custom_call.1']
    #allocation7 [shape = 'u8[1024]{0}', space=vmem, size = 0x400, scoped, tag = 'input window, operand 2, single buffered']
    #allocation8 [shape = 'u8[2048]{0}', space=vmem, size = 0x800, scoped, tag = 'output window, operand 0, single buffered']
    %8 = vsyncpa [#allocation3], 0
    %s9 = scalar_lea.sflag [#allocation3], 1
    %10 = vsyncpa %s9, 0
    %11 = vsyncpa [#allocation6], 0
    %12 = vsyncpa [#allocation4], 0
    loop: start=0, step=1, limit=4
    $region2: #{tpu_custom_call.1} parent=1 // loop_pre_header
      _
    $region3: #{tpu_custom_call.1} parent=1 // loop_header
      %s14 = sphi 0, %s18
      %p15 = scmp.ge.s32.totalorder %s14, 4
      %s24 = sphi 0, %s26
      %s27 = sphi 0, %s24
      %s28 = sphi 0, %s27
      %s44 = sphi 0, %s28
      %s48 = sphi 0, %s48
      %s50 = sphi 0, %s48
      %s51 = sphi 0, %s50
      %s65 = sphi 0, %s51
      %s69 = sphi 0, %s69
      %s71 = sphi 0, %s69
      %s72 = sphi 0, %s71
      %s86 = sphi 0, %s72
      %s90 = sphi 0, %s90
      %s92 = sphi 0, %s90
      %s93 = sphi 0, %s92
      %s107 = sphi 0, %s93
    $region4: #{tpu_custom_call.1} parent=1 // loop_header_branch
      %17 = sbr.rel (%p15) target = $region8
    $region5: #{tpu_custom_call.1} parent=1 // loop_body
      %s19 = ssub.s32 %s14, 1
      %s20 = ssub.s32 %s14, 2
      %s21 = sadd.s32 %s14, 1
      %s22 = ssub.s32 %s14, %s21
      %p23 = scmp.eq.s32.totalorder %s22, 0
      %s25 = sadd.s32 %s24, 1
      %s26 = scalar_select %p23, %s24, %s25
      %p29 = pneg %p23
      %p30 = scmp.eq.s32.totalorder %s14, 1
      %p31 = por %p29, %p30
      %p32 = scmp.ne.s32.totalorder %s24, %s27
      %p33 = scmp.eq.s32.totalorder %s14, 0
      %p34 = por %p32, %p33
      %p35 = scmp.ne.s32.totalorder %s24, %s27
      %p36 = scmp.eq.s32.totalorder %s19, 1
      %p37 = por %p35, %p36
      %p38 = scmp.ne.s32.totalorder %s27, %s28
      %p39 = scmp.eq.s32.totalorder %s19, 0
      %p40 = por %p38, %p39
      %p41 = scmp.ne.s32.totalorder %s27, %s28
      %p42 = scmp.eq.s32.totalorder %s20, 1
      %p43 = por %p41, %p42
      %p45 = scmp.ne.s32.totalorder %s28, %s44
      %p46 = scmp.eq.s32.totalorder %s20, 0
      %p47 = por %p45, %p46
      %s49 = sadd.s32 %s48, 1
      %p52 = scmp.eq.s32.totalorder %s14, 1
      %p53 = scmp.ne.s32.totalorder %s48, %s50
      %p54 = scmp.eq.s32.totalorder %s14, 0
      %p55 = por %p53, %p54
      %p56 = scmp.ne.s32.totalorder %s48, %s50
      %p57 = scmp.eq.s32.totalorder %s19, 1
      %p58 = por %p56, %p57
      %p59 = scmp.ne.s32.totalorder %s50, %s51
      %p60 = scmp.eq.s32.totalorder %s19, 0
      %p61 = por %p59, %p60
      %p62 = scmp.ne.s32.totalorder %s50, %s51
      %p63 = scmp.eq.s32.totalorder %s20, 1
      %p64 = por %p62, %p63
      %p66 = scmp.ne.s32.totalorder %s51, %s65
      %p67 = scmp.eq.s32.totalorder %s20, 0
      %p68 = por %p66, %p67
      %s70 = sadd.s32 %s69, 1
      %p73 = scmp.eq.s32.totalorder %s14, 1
      %p74 = scmp.ne.s32.totalorder %s69, %s71
      %p75 = scmp.eq.s32.totalorder %s14, 0
      %p76 = por %p74, %p75
      %p77 = scmp.ne.s32.totalorder %s69, %s71
      %p78 = scmp.eq.s32.totalorder %s19, 1
      %p79 = por %p77, %p78
      %p80 = scmp.ne.s32.totalorder %s71, %s72
      %p81 = scmp.eq.s32.totalorder %s19, 0
      %p82 = por %p80, %p81
      %p83 = scmp.ne.s32.totalorder %s71, %s72
      %p84 = scmp.eq.s32.totalorder %s20, 1
      %p85 = por %p83, %p84
      %p87 = scmp.ne.s32.totalorder %s72, %s86
      %p88 = scmp.eq.s32.totalorder %s20, 0
      %p89 = por %p87, %p88
      %s91 = sadd.s32 %s90, 1
      %p94 = scmp.eq.s32.totalorder %s14, 1
      %p95 = scmp.ne.s32.totalorder %s90, %s92
      %p96 = scmp.eq.s32.totalorder %s14, 0
      %p97 = por %p95, %p96
      %p98 = scmp.ne.s32.totalorder %s90, %s92
      %p99 = scmp.eq.s32.totalorder %s19, 1
      %p100 = por %p98, %p99
      %p101 = scmp.ne.s32.totalorder %s92, %s93
      %p102 = scmp.eq.s32.totalorder %s19, 0
      %p103 = por %p101, %p102
      %p104 = scmp.ne.s32.totalorder %s92, %s93
      %p105 = scmp.eq.s32.totalorder %s20, 1
      %p106 = por %p104, %p105
      %p108 = scmp.ne.s32.totalorder %s93, %s107
      %p109 = scmp.eq.s32.totalorder %s20, 0
      %p110 = por %p108, %p109
      %p111 = scmp.le.s32.totalorder 1, %s14
      %p112 = scmp.lt.s32.totalorder %s14, 3
      %p113 = pnand %p111, %p112
      %p114 = pneg %p113
      // Predicated region
      $region9: #{tpu_custom_call.1} parent=5 // pred_check
        _
      $region10: #{tpu_custom_call.1} parent=5 // pred_check_branch
        %116 = sbr.rel (%p113) target = $region12
      $region11: #{tpu_custom_call.1} parent=5 // pred_region
        %s117 = ssub.s32 %s14, 1
        // Predicated region
        $region13: #{tpu_custom_call.1} parent=11 // pred_check
          %p118 = pneg %p61
        $region14: #{tpu_custom_call.1} parent=11 // pred_check_branch
          %120 = sbr.rel (%p118) target = $region16
        $region15: #{tpu_custom_call.1} parent=11 // pred_region
          %122 = vsyncadd [#allocation6], 0
          %s123 = sshll.u32 %s1, 4
          %s124 = int_to_ptr.hbm [resolvable:$true] %s123
          %s125 = sshll.u32 [#allocation5], 4
          %s126 = int_to_ptr.vmem [resolvable:$true] %s125
          %131 = dma.hbm_to_vmem [thread:$0]  %s124, 4096, %s126, [#allocation6], 256, 256, 16
        $region16: #{tpu_custom_call.1} parent=11 // pred_fallthru
          _
        // Predicated region
        $region17: #{tpu_custom_call.1} parent=11 // pred_check
          %p132 = pneg %p82
        $region18: #{tpu_custom_call.1} parent=11 // pred_check_branch
          %134 = sbr.rel (%p132) target = $region20
        $region19: #{tpu_custom_call.1} parent=11 // pred_region
          %136 = vsyncadd [#allocation6], 0
          %s138 = sshll.u32 %s2, 4
          %s139 = int_to_ptr.hbm [resolvable:$true] %s138
          %s140 = sshll.u32 [#allocation7], 4
          %s141 = int_to_ptr.vmem [resolvable:$true] %s140
          %143 = dma.hbm_to_vmem [thread:$0]  %s139, 32, %s141, [#allocation6]
        $region20: #{tpu_custom_call.1} parent=11 // pred_fallthru
          _
      $region12: #{tpu_custom_call.1} parent=5 // pred_fallthru
        _
      %p144 = scmp.lt.s32.totalorder %s14, 2
      // Predicated region
      $region21: #{tpu_custom_call.1} parent=5 // pred_check
        %p145 = pneg %p144
      $region22: #{tpu_custom_call.1} parent=5 // pred_check_branch
        %147 = sbr.rel (%p145) target = $region24
      $region23: #{tpu_custom_call.1} parent=5 // pred_region
        // Predicated region
        $region25: #{tpu_custom_call.1} parent=23 // pred_check
          %p148 = pneg %p34
        $region26: #{tpu_custom_call.1} parent=23 // pred_check_branch
          %150 = sbr.rel (%p148) target = $region28
        $region27: #{tpu_custom_call.1} parent=23 // pred_region
          %s151 = sand.u32 %s24, 1
          %s152 = scalar_lea.sflag [#allocation3], %s151
          %s153 = sand.u32 %s24, 1
          %s154 = smul.addr %s153, 16
          %s155 = scalar_lea.vmem [#allocation2], %s154
          %s156 = smul.u32 2, %s14
          %158 = vsyncadd %s152, 0
          %s159 = smul.addr %s156, 8
          %s160 = scalar_lea.hbm %s0, %s159
          %s161 = sshll.u32 %s160, 4
          %s162 = int_to_ptr.hbm [resolvable:$true] %s161
          %s163 = sshll.u32 %s155, 4
          %s164 = int_to_ptr.vmem [resolvable:$true] %s163
          %169 = dma.hbm_to_vmem [thread:$0]  %s162, 256, %s164, %s152, 128, 128, 8
        $region28: #{tpu_custom_call.1} parent=23 // pred_fallthru
          _
      $region24: #{tpu_custom_call.1} parent=5 // pred_fallthru
        _
      %p170 = scmp.le.s32.totalorder 1, %s14
      %p171 = scmp.lt.s32.totalorder %s14, 3
      %p172 = pnand %p170, %p171
      %p173 = pneg %p172
      // Predicated region
      $region29: #{tpu_custom_call.1} parent=5 // pred_check
        _
      $region30: #{tpu_custom_call.1} parent=5 // pred_check_branch
        %175 = sbr.rel (%p172) target = $region32
      $region31: #{tpu_custom_call.1} parent=5 // pred_region
        %s176 = ssub.s32 %s14, 1
        %s177 = sand.u32 %s27, 1
        %s178 = scalar_lea.sflag [#allocation3], %s177
        %s179 = sand.u32 %s27, 1
        %s180 = smul.addr %s179, 16
        %s181 = scalar_lea.vmem [#allocation2], %s180
        // Predicated region
        $region33: #{tpu_custom_call.1} parent=31 // pred_check
          %p182 = pneg %p40
        $region34: #{tpu_custom_call.1} parent=31 // pred_check_branch
          %184 = sbr.rel (%p182) target = $region36
        $region35: #{tpu_custom_call.1} parent=31 // pred_region
          %186 = dma.done %s178, 256
        $region36: #{tpu_custom_call.1} parent=31 // pred_fallthru
          _
        // Predicated region
        $region37: #{tpu_custom_call.1} parent=31 // pred_check
          %p187 = pneg %p61
        $region38: #{tpu_custom_call.1} parent=31 // pred_check_branch
          %189 = sbr.rel (%p187) target = $region40
        $region39: #{tpu_custom_call.1} parent=31 // pred_region
          %191 = dma.done [#allocation6], 4096
        $region40: #{tpu_custom_call.1} parent=31 // pred_fallthru
          _
        // Predicated region
        $region41: #{tpu_custom_call.1} parent=31 // pred_check
          %p192 = pneg %p82
        $region42: #{tpu_custom_call.1} parent=31 // pred_check_branch
          %194 = sbr.rel (%p192) target = $region44
        $region43: #{tpu_custom_call.1} parent=31 // pred_region
          %196 = dma.done [#allocation6], 32
        $region44: #{tpu_custom_call.1} parent=31 // pred_fallthru
          _
        %s197 = sand.u32 %s27, 1
        %s198 = scalar_lea.sflag [#allocation3], %s197
        %s199 = sand.u32 %s27, 1
        %s200 = smul.addr %s199, 16
        %s201 = scalar_lea.vmem [#allocation2], %s200
        %p202 = pneg %p40
        %p203 = pneg %p37
        %p204 = pneg %p61
        %p205 = pneg %p58
        %p206 = pneg %p82
        %p207 = pneg %p79
        %p208 = pneg %p103
        %p209 = pneg %p100
        %s210 = smul.u32 2, %s19
        %p211 = scmp.eq.s32.totalorder %s19, 0
        // Predicated region
        $region45: #{tpu_custom_call.1} parent=31 // pred_check
          %p212 = pneg %p211
        $region46: #{tpu_custom_call.1} parent=31 // pred_check_branch
          %214 = sbr.rel (%p212) target = $region48
        $region47: #{tpu_custom_call.1} parent=31 // pred_region
          %215 = vst [vmem:[#allocation8] sm:$0xf] 0.0
        $region48: #{tpu_custom_call.1} parent=31 // pred_fallthru
          _
        %v216 = vld [vmem:[%s181] sm:$0xff]
        %v217 = vld [vmem:[%s181 + $0x8] sm:$0xff]
        %v218 = vld [vmem:[#allocation5] sm:$0xff]
        %v219 = vld [vmem:[#allocation5 + $0x8] sm:$0xff]
        %v220 = vld [vmem:[#allocation5 + $0x10] sm:$0xff]
        %v221 = vld [vmem:[#allocation5 + $0x18] sm:$0xff]
        %v222 = vld [vmem:[#allocation5 + $0x20] sm:$0xff]
        %v223 = vld [vmem:[#allocation5 + $0x28] sm:$0xff]
        %v224 = vld [vmem:[#allocation5 + $0x30] sm:$0xff]
        %v225 = vld [vmem:[#allocation5 + $0x38] sm:$0xff]
        %v226 = vld [vmem:[#allocation5 + $0x40] sm:$0xff]
        %v227 = vld [vmem:[#allocation5 + $0x48] sm:$0xff]
        %v228 = vld [vmem:[#allocation5 + $0x50] sm:$0xff]
        %v229 = vld [vmem:[#allocation5 + $0x58] sm:$0xff]
        %v230 = vld [vmem:[#allocation5 + $0x60] sm:$0xff]
        %v231 = vld [vmem:[#allocation5 + $0x68] sm:$0xff]
        %v232 = vld [vmem:[#allocation5 + $0x70] sm:$0xff]
        %v233 = vld [vmem:[#allocation5 + $0x78] sm:$0xff]
        %v234 = vld [vmem:[#allocation5 + $0x80] sm:$0xff]
        %v235 = vld [vmem:[#allocation5 + $0x88] sm:$0xff]
        %v236 = vld [vmem:[#allocation5 + $0x90] sm:$0xff]
        %v237 = vld [vmem:[#allocation5 + $0x98] sm:$0xff]
        %v238 = vld [vmem:[#allocation5 + $0xa0] sm:$0xff]
        %v239 = vld [vmem:[#allocation5 + $0xa8] sm:$0xff]
        %v240 = vld [vmem:[#allocation5 + $0xb0] sm:$0xff]
        %v241 = vld [vmem:[#allocation5 + $0xb8] sm:$0xff]
        %v242 = vld [vmem:[#allocation5 + $0xc0] sm:$0xff]
        %v243 = vld [vmem:[#allocation5 + $0xc8] sm:$0xff]
        %v244 = vld [vmem:[#allocation5 + $0xd0] sm:$0xff]
        %v245 = vld [vmem:[#allocation5 + $0xd8] sm:$0xff]
        %v246 = vld [vmem:[#allocation5 + $0xe0] sm:$0xff]
        %v247 = vld [vmem:[#allocation5 + $0xe8] sm:$0xff]
        %v248 = vld [vmem:[#allocation5 + $0xf0] sm:$0xff]
        %v249 = vld [vmem:[#allocation5 + $0xf8] sm:$0xff]
        %v250 = vld [vmem:[#allocation7] sm:$0x3]
        %v252 = vperm.slane %v250, 0
        %v253 = vperm.slane %v250, 1
        %256 = vmatpush.msra.mxu0 %v248
        %257 = vmatpush.msra.mxu0 %v246
        %258 = vmatpush.msra.mxu0 %v244
        %259 = vmatpush.msra.mxu0 %v242
        %260 = vmatpush.msra.mxu0 %v240
        %261 = vmatpush.msra.mxu0 %v238
        %262 = vmatpush.msra.mxu0 %v236
        %263 = vmatpush.msra.mxu0 %v234
        %264 = vmatpush.msra.mxu0 %v232
        %265 = vmatpush.msra.mxu0 %v230
        %266 = vmatpush.msra.mxu0 %v228
        %267 = vmatpush.msra.mxu0 %v226
        %268 = vmatpush.msra.mxu0 %v224
        %269 = vmatpush.msra.mxu0 %v222
        %270 = vmatpush.msra.mxu0 %v220
        %271 = vmatpush.msra.mxu0 %v218
        %272 = vmatmul.f32.gmra.mxu0 %v216
        %v273 = vpop.f32.mrf.mxu0
        %v274 = vadd.f32 %v252, %v273
        %275 = vmatmul.f32.gmra.mxu0 %v217
        %v276 = vpop.f32.mrf.mxu0
        %v277 = vadd.f32 %v252, %v276
        %278 = vdwg.mxu0
        %279 = vmatpush.msra.mxu0 %v249
        %280 = vmatpush.msra.mxu0 %v247
        %281 = vmatpush.msra.mxu0 %v245
        %282 = vmatpush.msra.mxu0 %v243
        %283 = vmatpush.msra.mxu0 %v241
        %284 = vmatpush.msra.mxu0 %v239
        %285 = vmatpush.msra.mxu0 %v237
        %286 = vmatpush.msra.mxu0 %v235
        %287 = vmatpush.msra.mxu0 %v233
        %288 = vmatpush.msra.mxu0 %v231
        %289 = vmatpush.msra.mxu0 %v229
        %290 = vmatpush.msra.mxu0 %v227
        %291 = vmatpush.msra.mxu0 %v225
        %292 = vmatpush.msra.mxu0 %v223
        %293 = vmatpush.msra.mxu0 %v221
        %294 = vmatpush.msra.mxu0 %v219
        %295 = vmatmul.f32.gmra.mxu0 %v216
        %v296 = vpop.f32.mrf.mxu0
        %v297 = vadd.f32 %v253, %v296
        %298 = vmatmul.f32.gmra.mxu0 %v217
        %v299 = vpop.f32.mrf.mxu0
        %v300 = vadd.f32 %v253, %v299
        %301 = vdwg.mxu0
        %v302 = vmax.f32 %v274, 0.0
        %v303 = vmax.f32 %v297, 0.0
        %v304 = vmax.f32 %v277, 0.0
        %v305 = vmax.f32 %v300, 0.0
        %v306 = vld [vmem:[#allocation8] sm:$0xf]
        %v311 = vrot.slane %v303, 6
        %v312 = vrot.slane %v305, 6
        %vm313 = vcmask 1041408
        %v314 = vsel %vm313, %v302, %v311
        %vm315 = vcmask 1043458
        %v316 = vsel %vm315, %v302, %v311
        %v317 = vrot.slane %v316, 2
        %vm318 = vcmask 1045508
        %v319 = vsel %vm318, %v302, %v311
        %v320 = vrot.slane %v319, 4
        %vm321 = vcmask 1045504
        %v322 = vsel %vm321, %v311, %v302
        %v323 = vrot.slane %v322, 6
        %v324 = vsel %vm313, %v304, %v312
        %v325 = vsel %vm315, %v304, %v312
        %v326 = vrot.slane %v325, 2
        %v327 = vsel %vm318, %v304, %v312
        %v328 = vrot.slane %v327, 4
        %v329 = vsel %vm321, %v312, %v304
        %v330 = vrot.slane %v329, 6
        %331 = vst [vmem:[#allocation1] ss:$4 sm:$0xff] %v314
        %v332 = vld.sshfl [vmem:[#allocation1] sm:$0xff pattern:$0x73625140]
        %v333 = vld.sshfl [vmem:[#allocation1 + $0x8] sm:$0xff pattern:$0x73625140]
        %s334 = scalar_lea.vmem [#allocation1], 32
        %335 = vst [vmem:[%s334] ss:$4 sm:$0xff] %v317
        %v336 = vld.sshfl [vmem:[#allocation1 + $0x20] sm:$0xff pattern:$0x73625140]
        %v337 = vld.sshfl [vmem:[#allocation1 + $0x28] sm:$0xff pattern:$0x73625140]
        %338 = vst [vmem:[#allocation1] ss:$4 sm:$0xff] %v320
        %v339 = vld.sshfl [vmem:[#allocation1] sm:$0xff pattern:$0x73625140]
        %v340 = vld.sshfl [vmem:[#allocation1 + $0x8] sm:$0xff pattern:$0x73625140]
        %341 = vst [vmem:[%s334] ss:$4 sm:$0xff] %v323
        %v342 = vld.sshfl [vmem:[#allocation1 + $0x20] sm:$0xff pattern:$0x73625140]
        %v343 = vld.sshfl [vmem:[#allocation1 + $0x28] sm:$0xff pattern:$0x73625140]
        %344 = vst [vmem:[#allocation1] ss:$4 sm:$0xff] %v324
        %v345 = vld.sshfl [vmem:[#allocation1] sm:$0xff pattern:$0x73625140]
        %v346 = vld.sshfl [vmem:[#allocation1 + $0x8] sm:$0xff pattern:$0x73625140]
        %347 = vst [vmem:[%s334] ss:$4 sm:$0xff] %v326
        %v348 = vld.sshfl [vmem:[#allocation1 + $0x20] sm:$0xff pattern:$0x73625140]
        %v349 = vld.sshfl [vmem:[#allocation1 + $0x28] sm:$0xff pattern:$0x73625140]
        %350 = vst [vmem:[#allocation1] ss:$4 sm:$0xff] %v328
        %v351 = vld.sshfl [vmem:[#allocation1] sm:$0xff pattern:$0x73625140]
        %v352 = vld.sshfl [vmem:[#allocation1 + $0x8] sm:$0xff pattern:$0x73625140]
        %353 = vst [vmem:[%s334] ss:$4 sm:$0xff] %v330
        %v354 = vld.sshfl [vmem:[#allocation1 + $0x20] sm:$0xff pattern:$0x73625140]
        %v355 = vld.sshfl [vmem:[#allocation1 + $0x28] sm:$0xff pattern:$0x73625140]
        %v372 = vsel %vm313, %v332, 0.0
        %v373 = vsel %vm313, %v336, 0.0
        %v374 = vadd.f32 %v372, %v373
        %v375 = vsel %vm313, %v339, 0.0
        %v376 = vadd.f32 %v374, %v375
        %v377 = vsel %vm313, %v342, 0.0
        %v378 = vadd.f32 %v376, %v377
        %v379 = vsel %vm313, %v345, 0.0
        %v380 = vadd.f32 %v378, %v379
        %v381 = vsel %vm313, %v348, 0.0
        %v382 = vadd.f32 %v380, %v381
        %v383 = vsel %vm313, %v351, 0.0
        %v384 = vadd.f32 %v382, %v383
        %v385 = vsel %vm313, %v354, 0.0
        %v386 = vadd.f32 %v384, %v385
        %v387 = vsel %vm313, %v333, 0.0
        %v388 = vsel %vm313, %v337, 0.0
        %v389 = vadd.f32 %v387, %v388
        %v390 = vsel %vm313, %v340, 0.0
        %v391 = vadd.f32 %v389, %v390
        %v392 = vsel %vm313, %v343, 0.0
        %v393 = vadd.f32 %v391, %v392
        %v394 = vsel %vm313, %v346, 0.0
        %v395 = vadd.f32 %v393, %v394
        %v396 = vsel %vm313, %v349, 0.0
        %v397 = vadd.f32 %v395, %v396
        %v398 = vsel %vm313, %v352, 0.0
        %v399 = vadd.f32 %v397, %v398
        %v400 = vsel %vm313, %v355, 0.0
        %v401 = vadd.f32 %v399, %v400
        %v404 = vrot.slane %v401, 6
        %v405 = vsel %vm313, %v386, %v404
        %v407 = vadd.f32 %v306, %v405
        %408 = vst [vmem:[#allocation8] sm:$0xf] %v407
        %p409 = scmp.eq.s32.totalorder %s19, 1
        // Predicated region
        $region49: #{tpu_custom_call.1} parent=31 // pred_check
          %p410 = pneg %p409
        $region50: #{tpu_custom_call.1} parent=31 // pred_check_branch
          %412 = sbr.rel (%p410) target = $region52
        $region51: #{tpu_custom_call.1} parent=31 // pred_region
          %v413 = vld [vmem:[#allocation8] sm:$0xf]
          %v414 = vmul.f32 %v413, 0.0625
          %415 = vst [vmem:[#allocation8] sm:$0xf] %v414
        $region52: #{tpu_custom_call.1} parent=31 // pred_fallthru
          _
        // Predicated region
        $region53: #{tpu_custom_call.1} parent=31 // pred_check
          %p416 = pneg %p100
        $region54: #{tpu_custom_call.1} parent=31 // pred_check_branch
          %418 = sbr.rel (%p416) target = $region56
        $region55: #{tpu_custom_call.1} parent=31 // pred_region
          %420 = vsyncadd [#allocation4], 0
          %s422 = sshll.u32 [#allocation8], 4
          %s423 = int_to_ptr.vmem [resolvable:$true] %s422
          %s424 = sshll.u32 %s3, 4
          %s425 = int_to_ptr.hbm [resolvable:$true] %s424
          %427 = dma.vmem_to_hbm [thread:$0]  %s423, 64, %s425, [#allocation4]
        $region56: #{tpu_custom_call.1} parent=31 // pred_fallthru
          _
        // Predicated region
        $region57: #{tpu_custom_call.1} parent=31 // pred_check
          %p428 = pneg %p100
        $region58: #{tpu_custom_call.1} parent=31 // pred_check_branch
          %430 = sbr.rel (%p428) target = $region60
        $region59: #{tpu_custom_call.1} parent=31 // pred_region
          %432 = dma.done [#allocation4], 64
        $region60: #{tpu_custom_call.1} parent=31 // pred_fallthru
          _
      $region32: #{tpu_custom_call.1} parent=5 // pred_fallthru
        _
      %p433 = scmp.le.s32.totalorder 2, %s14
      // Predicated region
      $region61: #{tpu_custom_call.1} parent=5 // pred_check
        %p434 = pneg %p433
      $region62: #{tpu_custom_call.1} parent=5 // pred_check_branch
        %436 = sbr.rel (%p434) target = $region64
      $region63: #{tpu_custom_call.1} parent=5 // pred_region
        %s437 = ssub.s32 %s14, 2
      $region64: #{tpu_custom_call.1} parent=5 // pred_fallthru
        _
    $region6: #{tpu_custom_call.1} parent=1 // loop_footer
      %s18 = sadd.s32 1, %s14
    $region7: #{tpu_custom_call.1} parent=1 // loop_footer_branch
      %13 = sbr.rel target = $region3
    $region8: #{tpu_custom_call.1} parent=1 // loop_exit
      _
    %438 = vsyncpa [#allocation3], 1
    %s439 = scalar_lea.sflag [#allocation3], 1
    %440 = vsyncpa %s439, 1
    %441 = vsyncpa [#allocation6], 1
    %442 = vsyncpa [#allocation4], 1
    %s443 = scalar_lea.sflag [#allocation4], 1
    %444 = vsyncpa %s443, 1

</llo_original>
